<compile_context>
chip_gen: v7x
topology: tpu7x:2x2x1
jax: 0.10.0
libtpu: 0.0.40
codegen_flags: <defaults>
</compile_context>

<pallas_src>
import functools

import jax
import jax.numpy as jnp
from jax.experimental import pallas as pl
from jax.experimental.pallas import tpu as pltpu

BN_EPS = 1e-5


def _round_up(x, m):
    return (x + m - 1) // m * m


# ------------------------------ Pallas kernel -------------------------------

def _conv3x3x3_kernel(x_ref, w_ref, b_ref, o_ref):
    """One (n, depth-block) step: Td output depth slices via 3 banded matmuls.

    x_ref : (D+2, H+2, W*Cin)     bf16  padded activation (full depth, one n)
    w_ref : (3, 3*W*Cin, W*Cout)  bf16  (kh,kw)-banded weights, BN scale folded
    b_ref : (1, W*Cout)           f32   folded BN bias
    o_ref : (Td, H, W*Cout)             ReLU(conv * scale + bias)
    """
    td, h_out, n_out = o_ref.shape
    k_in = x_ref.shape[-1]
    d0 = pl.program_id(1) * td

    # Accumulator starts from the folded BN bias -> no epilogue add.
    acc = jnp.broadcast_to(b_ref[...], (td * h_out, n_out))

    # One matmul per depth tap kd; kh (and kw, via the band) live in the
    # reduction dim:  M = Td*H, K = 3*W*Cin, N = W*Cout.
    for kd in range(3):
        parts = [
            x_ref[pl.ds(d0 + kd, td), pl.ds(kh, h_out), :]          # (Td, H, W*Cin)
            .reshape(td * h_out, k_in)
            for kh in range(3)
        ]
        lhs = jnp.concatenate(parts, axis=-1)                        # (Td*H, 3*W*Cin)
        acc = acc + jnp.dot(lhs, w_ref[kd],
                            preferred_element_type=jnp.float32)

    out = jnp.maximum(acc, 0.0).reshape(td, h_out, n_out)
    o_ref[...] = out.astype(o_ref.dtype)


# ------------------------------ wrapper --------------------------------------

def conv3x3x3_bn_relu(x_ncdhw, w_oidhw, gamma, beta, mean, var,
                      *, td_block=None, out_dtype=jnp.float32):
    """PyTorch Conv_3x3x3 forward (inference-mode BN + ReLU) via one Pallas kernel.

    out_dtype=jnp.bfloat16 halves output HBM traffic if the next layer accepts it.
    """
    N, Cin, D, H, W = x_ncdhw.shape
    Cout = w_oidhw.shape[0]

    # ---- fold BN (inference) into per-channel scale / bias ------------------
    scale = gamma / jnp.sqrt(var + BN_EPS)                           # (Cout,)
    bias = beta - mean * scale                                       # (Cout,)

    # ---- activations: NCDHW -> channels-last, pad D/H only, merge (W,Cin) ---
    x = jnp.transpose(x_ncdhw, (0, 2, 3, 4, 1))                      # NDHWC
    x = jnp.pad(x, ((0, 0), (1, 1), (1, 1), (0, 0), (0, 0)))         # pad D,H by 1
    Kin = W * Cin
    a = x.reshape(N, D + 2, H + 2, Kin).astype(jnp.bfloat16)

    # ---- weights: (kh,kw)-banded matrices, BN scale + W zero-pad folded -----
    wk = jnp.transpose(w_oidhw, (2, 3, 4, 1, 0)).astype(jnp.float32)  # (kd,kh,kw,ci,co)
    wk = wk * scale[None, None, None, None, :]
    iw = jnp.arange(W)[:, None]
    ow = jnp.arange(W)[None, :]
    # sel[kw, iw, w] = 1  iff  input col iw feeds output col w through tap kw
    sel = jnp.stack([(iw == ow + kw - 1).astype(jnp.float32) for kw in range(3)])
    # b[kd, kh, iw*Cin+ci, w*Cout+co] = sum_kw sel[kw,iw,w] * wk[kd,kh,kw,ci,co]
    b_mat = jnp.einsum('kpw,dhkio->dhpiwo', sel, wk)
    Nout = W * Cout
    b_mat = b_mat.reshape(3, 3 * Kin, Nout).astype(jnp.bfloat16)
    bias_row = jnp.tile(bias.astype(jnp.float32), W).reshape(1, Nout)

    # ---- depth tiling --------------------------------------------------------
    if td_block is None:
        td_block = next(t for t in range(min(D, 8), 0, -1) if D % t == 0)
    assert D % td_block == 0, (D, td_block)
    n_db = D // td_block
    Hp = H + 2

    # ---- VMEM budget (double-buffered blocks), capped for v7x's 64 MiB ------
    act_bytes = (D + 2) * _round_up(Hp, 16) * _round_up(Kin, 128) * 2
    wgt_bytes = 3 * _round_up(3 * Kin, 16) * _round_up(Nout, 128) * 2
    out_bytes = td_block * H * _round_up(Nout, 128) * jnp.dtype(out_dtype).itemsize
    est = 2 * (act_bytes + wgt_bytes + out_bytes)
    vmem_limit = int(min(56 << 20, max(32 << 20, 2 * est)))

    out = pl.pallas_call(
        _conv3x3x3_kernel,
        out_shape=jax.ShapeDtypeStruct((N, D, H, Nout), out_dtype),
        grid=(N, n_db),
        in_specs=[
            # Full padded-depth activation of one n; the constant block index
            # across the depth-block axis keeps it resident (single HBM fetch).
            pl.BlockSpec((None, D + 2, Hp, Kin), lambda n, db: (n, 0, 0, 0)),
            pl.BlockSpec((3, 3 * Kin, Nout), lambda n, db: (0, 0, 0)),   # resident
            pl.BlockSpec((1, Nout), lambda n, db: (0, 0)),               # resident
        ],
        out_specs=pl.BlockSpec((None, td_block, H, Nout),
                               lambda n, db: (n, db, 0, 0)),
        compiler_params=pltpu.CompilerParams(
            dimension_semantics=("parallel", "arbitrary"),
            vmem_limit_bytes=vmem_limit),
    )(a, b_mat, bias_row)

    # (N, D, H, W*Cout) -> NCDHW  (last-dim split reshape, then transpose)
    out = out.reshape(N, D, H, W, Cout)
    return jnp.transpose(out, (0, 4, 1, 2, 3))


# ------------------------------ self-test -------------------------------------

if __name__ == "__main__":
    key = jax.random.PRNGKey(0)
    kx, kw, kg, kb, km, kv = jax.random.split(key, 6)

    N, Cin, Cout, D, H, W = 2, 4, 8, 8, 16, 16
    x = jax.random.normal(kx, (N, Cin, D, H, W), jnp.float32)
    w = 0.2 * jax.random.normal(kw, (Cout, Cin, 3, 3, 3), jnp.float32)
    gamma = 1.0 + 0.1 * jax.random.normal(kg, (Cout,), jnp.float32)
    beta = 0.1 * jax.random.normal(kb, (Cout,), jnp.float32)
    mean = 0.1 * jax.random.normal(km, (Cout,), jnp.float32)
    var = 1.0 + 0.1 * jax.random.uniform(kv, (Cout,), jnp.float32)

    # td_block=4 -> grid (N, 2): exercises the depth-block tiling path.
    fn = jax.jit(functools.partial(conv3x3x3_bn_relu, td_block=4))
    out = jax.block_until_ready(fn(x, w, gamma, beta, mean, var))
    assert out.shape == (N, Cout, D, H, W), out.shape
    assert bool(jnp.all(jnp.isfinite(out)))

    # Reference: plain-JAX conv on the same bf16-rounded folded weights/inputs.
    scale = gamma / jnp.sqrt(var + BN_EPS)
    bias = beta - mean * scale
    xq = x.astype(jnp.bfloat16).astype(jnp.float32)
    wq = (w * scale[:, None, None, None, None]).astype(jnp.bfloat16).astype(jnp.float32)
    ref = jax.lax.conv_general_dilated(
        xq, wq, window_strides=(1, 1, 1),
        padding=((1, 1), (1, 1), (1, 1)),
        dimension_numbers=('NCDHW', 'OIDHW', 'NCDHW'),
        precision=jax.lax.Precision.HIGHEST)
    ref = jnp.maximum(ref + bias.reshape(1, -1, 1, 1, 1), 0.0)

    err = float(jnp.max(jnp.abs(out - ref)))
    assert err < 5e-2, f"max abs error vs reference conv: {err}"
    print("KERNEL_OK")
</pallas_src>

<mosaic_0001>
module attributes {stable_mosaic.version = 11 : i64} {
  func.func @_conv3x3x3_kernel(%arg0: i32, %arg1: i32, %arg2: memref<1x10x18x64xbf16, #tpu.memory_space<vmem>>, %arg3: memref<3x192x128xbf16, #tpu.memory_space<vmem>>, %arg4: memref<1x128xf32, #tpu.memory_space<vmem>>, %arg5: memref<1x4x16x128xf32, #tpu.memory_space<vmem>>) attributes {dimension_semantics = [#tpu.dimension_semantics<parallel>, #tpu.dimension_semantics<arbitrary>], iteration_bounds = array<i64: 2, 2>, scalar_prefetch = 0 : i64, scratch_operands = 0 : i64, tpu.core_type = #tpu.core_type<tc>, window_params = [{transform_indices = @transform_0, window_bounds = array<i64: 1, 10, 18, 64>}, {pipeline_mode = #tpu.pipeline_mode<synchronous>, transform_indices = @transform_1, window_bounds = array<i64: 3, 192, 128>}, {pipeline_mode = #tpu.pipeline_mode<synchronous>, transform_indices = @transform_2, window_bounds = array<i64: 1, 128>}, {transform_indices = @transform_3, window_bounds = array<i64: 1, 4, 16, 128>}]} {
    %c4_i32 = arith.constant 4 : i32
    %0 = arith.muli %arg1, %c4_i32 : i32
    %c0 = arith.constant 0 : index
    %c0_0 = arith.constant 0 : index
    %1 = vector.load %arg4[%c0, %c0_0] : memref<1x128xf32, #tpu.memory_space<vmem>>, vector<1x128xf32>
    %2 = vector.shape_cast %1 : vector<1x128xf32> to vector<1x128xf32>
    %3 = vector.broadcast %2 : vector<1x128xf32> to vector<64x128xf32>
    %c0_i32 = arith.constant 0 : i32
    %4 = arith.addi %0, %c0_i32 : i32
    %c0_1 = arith.constant 0 : index
    %5 = arith.index_cast %4 : i32 to index
    %c0_2 = arith.constant 0 : index
    %c0_3 = arith.constant 0 : index
    %6 = vector.load %arg2[%c0_1, %5, %c0_2, %c0_3] : memref<1x10x18x64xbf16, #tpu.memory_space<vmem>>, vector<1x4x16x64xbf16>
    %7 = vector.shape_cast %6 : vector<1x4x16x64xbf16> to vector<4x16x64xbf16>
    %8 = vector.shape_cast %7 : vector<4x16x64xbf16> to vector<64x64xbf16>
    %c0_i32_4 = arith.constant 0 : i32
    %9 = arith.addi %0, %c0_i32_4 : i32
    %c0_5 = arith.constant 0 : index
    %10 = arith.index_cast %9 : i32 to index
    %c1 = arith.constant 1 : index
    %c0_6 = arith.constant 0 : index
    %11 = vector.load %arg2[%c0_5, %10, %c1, %c0_6] : memref<1x10x18x64xbf16, #tpu.memory_space<vmem>>, vector<1x4x16x64xbf16>
    %12 = vector.shape_cast %11 : vector<1x4x16x64xbf16> to vector<4x16x64xbf16>
    %13 = vector.shape_cast %12 : vector<4x16x64xbf16> to vector<64x64xbf16>
    %c0_i32_7 = arith.constant 0 : i32
    %14 = arith.addi %0, %c0_i32_7 : i32
    %c0_8 = arith.constant 0 : index
    %15 = arith.index_cast %14 : i32 to index
    %c2 = arith.constant 2 : index
    %c0_9 = arith.constant 0 : index
    %16 = vector.load %arg2[%c0_8, %15, %c2, %c0_9] : memref<1x10x18x64xbf16, #tpu.memory_space<vmem>>, vector<1x4x16x64xbf16>
    %17 = vector.shape_cast %16 : vector<1x4x16x64xbf16> to vector<4x16x64xbf16>
    %18 = vector.shape_cast %17 : vector<4x16x64xbf16> to vector<64x64xbf16>
    %19 = tpu.concatenate %8, %13, %18 in 1 : vector<64x64xbf16>, vector<64x64xbf16>, vector<64x64xbf16> -> vector<64x192xbf16>
    %c0_10 = arith.constant 0 : index
    %c0_11 = arith.constant 0 : index
    %c0_12 = arith.constant 0 : index
    %20 = vector.load %arg3[%c0_10, %c0_11, %c0_12] : memref<3x192x128xbf16, #tpu.memory_space<vmem>>, vector<1x192x128xbf16>
    %21 = vector.shape_cast %20 : vector<1x192x128xbf16> to vector<192x128xbf16>
    %cst = arith.constant dense<0.000000e+00> : vector<64x128xf32>
    %22 = tpu.matmul %19, %21, %cst {dimension_numbers = #tpu.dot_dimension_numbers<[1], [0], [0], [1], [0, 0, 1, 1], [], []>} : vector<64x192xbf16>, vector<192x128xbf16>, vector<64x128xf32> -> vector<64x128xf32>
    %23 = arith.addf %3, %22 : vector<64x128xf32>
    %c1_i32 = arith.constant 1 : i32
    %24 = arith.addi %0, %c1_i32 : i32
    %c0_13 = arith.constant 0 : index
    %25 = arith.index_cast %24 : i32 to index
    %c0_14 = arith.constant 0 : index
    %c0_15 = arith.constant 0 : index
    %26 = vector.load %arg2[%c0_13, %25, %c0_14, %c0_15] : memref<1x10x18x64xbf16, #tpu.memory_space<vmem>>, vector<1x4x16x64xbf16>
    %27 = vector.shape_cast %26 : vector<1x4x16x64xbf16> to vector<4x16x64xbf16>
    %28 = vector.shape_cast %27 : vector<4x16x64xbf16> to vector<64x64xbf16>
    %c1_i32_16 = arith.constant 1 : i32
    %29 = arith.addi %0, %c1_i32_16 : i32
    %c0_17 = arith.constant 0 : index
    %30 = arith.index_cast %29 : i32 to index
    %c1_18 = arith.constant 1 : index
    %c0_19 = arith.constant 0 : index
    %31 = vector.load %arg2[%c0_17, %30, %c1_18, %c0_19] : memref<1x10x18x64xbf16, #tpu.memory_space<vmem>>, vector<1x4x16x64xbf16>
    %32 = vector.shape_cast %31 : vector<1x4x16x64xbf16> to vector<4x16x64xbf16>
    %33 = vector.shape_cast %32 : vector<4x16x64xbf16> to vector<64x64xbf16>
    %c1_i32_20 = arith.constant 1 : i32
    %34 = arith.addi %0, %c1_i32_20 : i32
    %c0_21 = arith.constant 0 : index
    %35 = arith.index_cast %34 : i32 to index
    %c2_22 = arith.constant 2 : index
    %c0_23 = arith.constant 0 : index
    %36 = vector.load %arg2[%c0_21, %35, %c2_22, %c0_23] : memref<1x10x18x64xbf16, #tpu.memory_space<vmem>>, vector<1x4x16x64xbf16>
    %37 = vector.shape_cast %36 : vector<1x4x16x64xbf16> to vector<4x16x64xbf16>
    %38 = vector.shape_cast %37 : vector<4x16x64xbf16> to vector<64x64xbf16>
    %39 = tpu.concatenate %28, %33, %38 in 1 : vector<64x64xbf16>, vector<64x64xbf16>, vector<64x64xbf16> -> vector<64x192xbf16>
    %c1_24 = arith.constant 1 : index
    %c0_25 = arith.constant 0 : index
    %c0_26 = arith.constant 0 : index
    %40 = vector.load %arg3[%c1_24, %c0_25, %c0_26] : memref<3x192x128xbf16, #tpu.memory_space<vmem>>, vector<1x192x128xbf16>
    %41 = vector.shape_cast %40 : vector<1x192x128xbf16> to vector<192x128xbf16>
    %cst_27 = arith.constant dense<0.000000e+00> : vector<64x128xf32>
    %42 = tpu.matmul %39, %41, %cst_27 {dimension_numbers = #tpu.dot_dimension_numbers<[1], [0], [0], [1], [0, 0, 1, 1], [], []>} : vector<64x192xbf16>, vector<192x128xbf16>, vector<64x128xf32> -> vector<64x128xf32>
    %43 = arith.addf %23, %42 : vector<64x128xf32>
    %c2_i32 = arith.constant 2 : i32
    %44 = arith.addi %0, %c2_i32 : i32
    %c0_28 = arith.constant 0 : index
    %45 = arith.index_cast %44 : i32 to index
    %c0_29 = arith.constant 0 : index
    %c0_30 = arith.constant 0 : index
    %46 = vector.load %arg2[%c0_28, %45, %c0_29, %c0_30] : memref<1x10x18x64xbf16, #tpu.memory_space<vmem>>, vector<1x4x16x64xbf16>
    %47 = vector.shape_cast %46 : vector<1x4x16x64xbf16> to vector<4x16x64xbf16>
    %48 = vector.shape_cast %47 : vector<4x16x64xbf16> to vector<64x64xbf16>
    %c2_i32_31 = arith.constant 2 : i32
    %49 = arith.addi %0, %c2_i32_31 : i32
    %c0_32 = arith.constant 0 : index
    %50 = arith.index_cast %49 : i32 to index
    %c1_33 = arith.constant 1 : index
    %c0_34 = arith.constant 0 : index
    %51 = vector.load %arg2[%c0_32, %50, %c1_33, %c0_34] : memref<1x10x18x64xbf16, #tpu.memory_space<vmem>>, vector<1x4x16x64xbf16>
    %52 = vector.shape_cast %51 : vector<1x4x16x64xbf16> to vector<4x16x64xbf16>
    %53 = vector.shape_cast %52 : vector<4x16x64xbf16> to vector<64x64xbf16>
    %c2_i32_35 = arith.constant 2 : i32
    %54 = arith.addi %0, %c2_i32_35 : i32
    %c0_36 = arith.constant 0 : index
    %55 = arith.index_cast %54 : i32 to index
    %c2_37 = arith.constant 2 : index
    %c0_38 = arith.constant 0 : index
    %56 = vector.load %arg2[%c0_36, %55, %c2_37, %c0_38] : memref<1x10x18x64xbf16, #tpu.memory_space<vmem>>, vector<1x4x16x64xbf16>
    %57 = vector.shape_cast %56 : vector<1x4x16x64xbf16> to vector<4x16x64xbf16>
    %58 = vector.shape_cast %57 : vector<4x16x64xbf16> to vector<64x64xbf16>
    %59 = tpu.concatenate %48, %53, %58 in 1 : vector<64x64xbf16>, vector<64x64xbf16>, vector<64x64xbf16> -> vector<64x192xbf16>
    %c2_39 = arith.constant 2 : index
    %c0_40 = arith.constant 0 : index
    %c0_41 = arith.constant 0 : index
    %60 = vector.load %arg3[%c2_39, %c0_40, %c0_41] : memref<3x192x128xbf16, #tpu.memory_space<vmem>>, vector<1x192x128xbf16>
    %61 = vector.shape_cast %60 : vector<1x192x128xbf16> to vector<192x128xbf16>
    %cst_42 = arith.constant dense<0.000000e+00> : vector<64x128xf32>
    %62 = tpu.matmul %59, %61, %cst_42 {dimension_numbers = #tpu.dot_dimension_numbers<[1], [0], [0], [1], [0, 0, 1, 1], [], []>} : vector<64x192xbf16>, vector<192x128xbf16>, vector<64x128xf32> -> vector<64x128xf32>
    %63 = arith.addf %43, %62 : vector<64x128xf32>
    %cst_43 = arith.constant 0.000000e+00 : f32
    %64 = vector.broadcast %cst_43 : f32 to vector<64x128xf32>
    %65 = arith.maximumf %63, %64 : vector<64x128xf32>
    %66 = vector.shape_cast %65 : vector<64x128xf32> to vector<4x16x128xf32>
    %c0_44 = arith.constant 0 : index
    %c0_45 = arith.constant 0 : index
    %c0_46 = arith.constant 0 : index
    %c0_47 = arith.constant 0 : index
    %67 = vector.load %arg5[%c0_44, %c0_45, %c0_46, %c0_47] : memref<1x4x16x128xf32, #tpu.memory_space<vmem>>, vector<1x4x16x128xf32>
    %68 = vector.shape_cast %67 : vector<1x4x16x128xf32> to vector<4x16x128xf32>
    %69 = vector.shape_cast %66 : vector<4x16x128xf32> to vector<1x4x16x128xf32>
    tpu.vector_store %arg5[%c0_44, %c0_45, %c0_46, %c0_47], %69 {strides = array<i32>} : memref<1x4x16x128xf32, #tpu.memory_space<vmem>>, vector<1x4x16x128xf32>,
    return
  }
  func.func @transform_0(%arg0: i32, %arg1: i32) -> (i32, i32, i32, i32) {
    %c0_i32 = arith.constant 0 : i32
    %c0_i32_0 = arith.constant 0 : i32
    %c0_i32_1 = arith.constant 0 : i32
    %c0_i32_2 = arith.constant 0 : i32
    return %arg0, %c0_i32, %c0_i32_0, %c0_i32_1 : i32, i32, i32, i32
  }
  func.func @transform_1(%arg0: i32, %arg1: i32) -> (i32, i32, i32) {
    %c0_i32 = arith.constant 0 : i32
    %c0_i32_0 = arith.constant 0 : i32
    %c0_i32_1 = arith.constant 0 : i32
    %c0_i32_2 = arith.constant 0 : i32
    return %c0_i32, %c0_i32_0, %c0_i32_1 : i32, i32, i32
  }
  func.func @transform_2(%arg0: i32, %arg1: i32) -> (i32, i32) {
    %c0_i32 = arith.constant 0 : i32
    %c0_i32_0 = arith.constant 0 : i32
    %c0_i32_1 = arith.constant 0 : i32
    return %c0_i32, %c0_i32_0 : i32, i32
  }
  func.func @transform_3(%arg0: i32, %arg1: i32) -> (i32, i32, i32, i32) {
    %c0_i32 = arith.constant 0 : i32
    %c0_i32_0 = arith.constant 0 : i32
    %c0_i32_1 = arith.constant 0 : i32
    return %arg0, %arg1, %c0_i32, %c0_i32_0 : i32, i32, i32, i32
  }
}

</mosaic_0001>

<llo_original>
// kernel: tile.8
$region0: #{tile.8}
  #allocation0 [shape = 's32[1]{0}', space=sflag, size = 0x4, scoped, tag = 'scoped memory for tile.8']
  %s0 = inlined_call_operand.vmem [shape: f32[8], index: 0, kind: input, shape index: {}]
  %s1 = inlined_call_operand.vmem [shape: f32[16,8], index: 1, kind: output, shape index: {}]
  // Predicated region
  $region2: #{tile.8} parent=0 // pred_check
    _
  $region3: #{tile.8} parent=0 // pred_check_branch
    %3 = sbr.rel (0) target = $region5
  $region4: #{tile.8} parent=0 // pred_region
    _
  $region5: #{tile.8} parent=0 // pred_fallthru
    _
  %v4 = vld [vmem:[%s0] ss:$0 sm:$0xff]
  %5 = vst [vmem:[%s1] sm:$0xff] %v4
  %s6 = scalar_lea.vmem %s1, 8
  %7 = vst [vmem:[%s6] sm:$0xff] %v4

// kernel: tile.9
$region0: #{tile.9}
  %s0 = inlined_call_operand.vmem [shape: f32[16,8], index: 0, kind: input, shape index: {}]
  %s1 = inlined_call_operand.vmem [shape: f32[1,128], index: 1, kind: output, shape index: {}]
  $region1: #{tile.9} parent=0
    #allocation0 [shape = 'u8[4096]{0}', space=vmem, size = 0x1000, scoped, tag = 'scoped mem for output reshape']
    %v2 = vld [vmem:[%s0] sm:$0x1]
    %vm3 = vcmask 64512
    %4 = vst.msk [vmem:[#allocation0] sm:$0x1] %vm3, %v2
    %s5 = scalar_lea.vmem %s0, 15
    %v6 = vld [vmem:[%s5] sm:$0x1]
    %7 = vrot.lane.b32.xlu0 %v6, 120
    %v8 = vpop.permute.xlu0 %7
    %vm9 = vcmask 1048512
    %10 = vst.msk [vmem:[#allocation0] sm:$0x1] %vm9, %v8
    %s11 = scalar_lea.vmem %s0, 14
    %v12 = vld [vmem:[%s11] sm:$0x1]
    %13 = vrot.lane.b32.xlu0 %v12, 112
    %v14 = vpop.permute.xlu0 %13
    %vm15 = vcmask 982912
    %16 = vst.msk [vmem:[#allocation0] sm:$0x1] %vm15, %v14
    %s17 = scalar_lea.vmem %s0, 13
    %v18 = vld [vmem:[%s17] sm:$0x1]
    %19 = vrot.lane.b32.xlu0 %v18, 104
    %v20 = vpop.permute.xlu0 %19
    %vm21 = vcmask 917312
    %22 = vst.msk [vmem:[#allocation0] sm:$0x1] %vm21, %v20
    %s23 = scalar_lea.vmem %s0, 12
    %v24 = vld [vmem:[%s23] sm:$0x1]
    %25 = vrot.lane.b32.xlu0 %v24, 96
    %v26 = vpop.permute.xlu0 %25
    %vm27 = vcmask 851712
    %28 = vst.msk [vmem:[#allocation0] sm:$0x1] %vm27, %v26
    %s29 = scalar_lea.vmem %s0, 11
    %v30 = vld [vmem:[%s29] sm:$0x1]
    %31 = vrot.lane.b32.xlu0 %v30, 88
    %v32 = vpop.permute.xlu0 %31
    %vm33 = vcmask 786112
    %34 = vst.msk [vmem:[#allocation0] sm:$0x1] %vm33, %v32
    %s35 = scalar_lea.vmem %s0, 10
    %v36 = vld [vmem:[%s35] sm:$0x1]
    %37 = vrot.lane.b32.xlu0 %v36, 80
    %v38 = vpop.permute.xlu0 %37
    %vm39 = vcmask 720512
    %40 = vst.msk [vmem:[#allocation0] sm:$0x1] %vm39, %v38
    %s41 = scalar_lea.vmem %s0, 9
    %v42 = vld [vmem:[%s41] sm:$0x1]
    %43 = vrot.lane.b32.xlu0 %v42, 72
    %v44 = vpop.permute.xlu0 %43
    %vm45 = vcmask 654912
    %46 = vst.msk [vmem:[#allocation0] sm:$0x1] %vm45, %v44
    %s47 = scalar_lea.vmem %s0, 8
    %v48 = vld [vmem:[%s47] sm:$0x1]
    %49 = vrot.lane.b32.xlu0 %v48, 64
    %v50 = vpop.permute.xlu0 %49
    %vm51 = vcmask 589312
    %52 = vst.msk [vmem:[#allocation0] sm:$0x1] %vm51, %v50
    %s53 = scalar_lea.vmem %s0, 7
    %v54 = vld [vmem:[%s53] sm:$0x1]
    %55 = vrot.lane.b32.xlu0 %v54, 56
    %v56 = vpop.permute.xlu0 %55
    %vm57 = vcmask 523712
    %58 = vst.msk [vmem:[#allocation0] sm:$0x1] %vm57, %v56
    %s59 = scalar_lea.vmem %s0, 6
    %v60 = vld [vmem:[%s59] sm:$0x1]
    %61 = vrot.lane.b32.xlu0 %v60, 48
    %v62 = vpop.permute.xlu0 %61
    %vm63 = vcmask 458112
    %64 = vst.msk [vmem:[#allocation0] sm:$0x1] %vm63, %v62
    %s65 = scalar_lea.vmem %s0, 5
    %v66 = vld [vmem:[%s65] sm:$0x1]
    %67 = vrot.lane.b32.xlu0 %v66, 40
    %v68 = vpop.permute.xlu0 %67
    %vm69 = vcmask 392512
    %70 = vst.msk [vmem:[#allocation0] sm:$0x1] %vm69, %v68
    %s71 = scalar_lea.vmem %s0, 4
    %v72 = vld [vmem:[%s71] sm:$0x1]
    %73 = vrot.lane.b32.xlu0 %v72, 32
    %v74 = vpop.permute.xlu0 %73
    %vm75 = vcmask 326912
    %76 = vst.msk [vmem:[#allocation0] sm:$0x1] %vm75, %v74
    %s77 = scalar_lea.vmem %s0, 3
    %v78 = vld [vmem:[%s77] sm:$0x1]
    %79 = vrot.lane.b32.xlu0 %v78, 24
    %v80 = vpop.permute.xlu0 %79
    %vm81 = vcmask 261312
    %82 = vst.msk [vmem:[#allocation0] sm:$0x1] %vm81, %v80
    %s83 = scalar_lea.vmem %s0, 2
    %v84 = vld [vmem:[%s83] sm:$0x1]
    %85 = vrot.lane.b32.xlu0 %v84, 16
    %v86 = vpop.permute.xlu0 %85
    %vm87 = vcmask 195712
    %88 = vst.msk [vmem:[#allocation0] sm:$0x1] %vm87, %v86
    %s89 = scalar_lea.vmem %s0, 1
    %v90 = vld [vmem:[%s89] sm:$0x1]
    %91 = vrot.lane.b32.xlu0 %v90, 8
    %v92 = vpop.permute.xlu0 %91
    %vm93 = vcmask 130112
    %94 = vst.msk [vmem:[#allocation0] sm:$0x1] %vm93, %v92
    %s96 = sshllo.u32 0, 1
    %v98 = vld [vmem:[#allocation0] sm:%s96]
    %s99 = sshllo.u32 0, 1
    %100 = vst [vmem:[%s1] sm:%s99] %v98

// kernel: conv3x3x3_bn_relu.1
$region0: #{conv3x3x3_bn_relu.1}
  #allocation0 [shape = 'u32[]', space=smem, size = 0x4, offset = 0x4, fixed_abs, tag = 'smem constant byte address 0x4 - core index']
  #allocation1 [shape = 'u32[144,128]{1,0:T(1,128)}', space=vmem, size = 0x12000, scoped, tag = 'internal scratch']
  %s0 = inlined_call_operand.vmem [shape: bf16[2,10,18,64], index: 0, kind: input, shape index: {}]
  %s1 = inlined_call_operand.vmem [shape: bf16[3,192,128], index: 1, kind: input, shape index: {}]
  %s2 = inlined_call_operand.vmem [shape: f32[1,128], index: 2, kind: input, shape index: {}]
  %s3 = inlined_call_operand.vmem [shape: f32[2,8,16,128], index: 3, kind: output, shape index: {}]
  %s4 = sld [smem:[#allocation0]]
  $region45: #{conv3x3x3_bn_relu.1} parent=0
    _
  %s6 = ssub.s32 1, %s4
  %s7 = scalar_select 0, %s6, %s4
  loop: start=0, step=1, limit=6
  $region2: #{conv3x3x3_bn_relu.1} parent=0 // loop_pre_header
    _
  $region3: #{conv3x3x3_bn_relu.1} parent=0 // loop_header
    %s9 = sphi 0, %s13
    %p10 = scmp.ge.s32.totalorder %s9, 6
    %s16 = sphi 0, %s28
    %s17 = sphi 0, %s24
    %s18 = sphi 0, %s16
    %s19 = sphi 0, %s17
    %s20 = sphi 0, %s18
    %s21 = sphi 0, %s19
    %s31 = sphi 0, %s33
    %s34 = sphi 0, %s31
    %s35 = sphi 0, %s34
    %s51 = sphi 0, %s35
    %s55 = sphi 0, %s55
    %s57 = sphi 0, %s55
    %s58 = sphi 0, %s57
    %s72 = sphi 0, %s58
    %s76 = sphi 0, %s76
    %s78 = sphi 0, %s76
    %s79 = sphi 0, %s78
    %s93 = sphi 0, %s79
    %s101 = sphi 0, %s103
    %s104 = sphi 0, %s101
    %s105 = sphi 0, %s104
    %s121 = sphi 0, %s105
  $region4: #{conv3x3x3_bn_relu.1} parent=0 // loop_header_branch
    %12 = sbr.rel (%p10) target = $region8
  $region5: #{conv3x3x3_bn_relu.1} parent=0 // loop_body
    %s14 = ssub.s32 %s9, 1
    %s15 = ssub.s32 %s9, 2
    %s22 = sadd.s32 1, %s17
    %p23 = scmp.ge.s32.totalorder %s22, 2
    %s24 = scalar_select %p23, 0, %s22
    %s25 = sadd.s32 1, %s16
    %s26 = scalar_select %p23, %s25, %s16
    %p27 = scmp.ge.s32.totalorder %s26, 2
    %s28 = scalar_select %p27, 0, %s26
    %s29 = ssub.s32 %s16, %s28
    %p30 = scmp.eq.s32.totalorder %s29, 0
    %s32 = sadd.s32 %s31, 1
    %s33 = scalar_select %p30, %s31, %s32
    %p36 = pneg %p30
    %p37 = scmp.eq.s32.totalorder %s9, 3
    %p38 = por %p36, %p37
    %p39 = scmp.ne.s32.totalorder %s31, %s34
    %p40 = scmp.eq.s32.totalorder %s9, 0
    %p41 = por %p39, %p40
    %p42 = scmp.ne.s32.totalorder %s31, %s34
    %p43 = scmp.eq.s32.totalorder %s14, 3
    %p44 = por %p42, %p43
    %p45 = scmp.ne.s32.totalorder %s34, %s35
    %p46 = scmp.eq.s32.totalorder %s14, 0
    %p47 = por %p45, %p46
    %p48 = scmp.ne.s32.totalorder %s34, %s35
    %p49 = scmp.eq.s32.totalorder %s15, 3
    %p50 = por %p48, %p49
    %p52 = scmp.ne.s32.totalorder %s35, %s51
    %p53 = scmp.eq.s32.totalorder %s15, 0
    %p54 = por %p52, %p53
    %s56 = sadd.s32 %s55, 1
    %p59 = scmp.eq.s32.totalorder %s9, 3
    %p60 = scmp.ne.s32.totalorder %s55, %s57
    %p61 = scmp.eq.s32.totalorder %s9, 0
    %p62 = por %p60, %p61
    %p63 = scmp.ne.s32.totalorder %s55, %s57
    %p64 = scmp.eq.s32.totalorder %s14, 3
    %p65 = por %p63, %p64
    %p66 = scmp.ne.s32.totalorder %s57, %s58
    %p67 = scmp.eq.s32.totalorder %s14, 0
    %p68 = por %p66, %p67
    %p69 = scmp.ne.s32.totalorder %s57, %s58
    %p70 = scmp.eq.s32.totalorder %s15, 3
    %p71 = por %p69, %p70
    %p73 = scmp.ne.s32.totalorder %s58, %s72
    %p74 = scmp.eq.s32.totalorder %s15, 0
    %p75 = por %p73, %p74
    %s77 = sadd.s32 %s76, 1
    %p80 = scmp.eq.s32.totalorder %s9, 3
    %p81 = scmp.ne.s32.totalorder %s76, %s78
    %p82 = scmp.eq.s32.totalorder %s9, 0
    %p83 = por %p81, %p82
    %p84 = scmp.ne.s32.totalorder %s76, %s78
    %p85 = scmp.eq.s32.totalorder %s14, 3
    %p86 = por %p84, %p85
    %p87 = scmp.ne.s32.totalorder %s78, %s79
    %p88 = scmp.eq.s32.totalorder %s14, 0
    %p89 = por %p87, %p88
    %p90 = scmp.ne.s32.totalorder %s78, %s79
    %p91 = scmp.eq.s32.totalorder %s15, 3
    %p92 = por %p90, %p91
    %p94 = scmp.ne.s32.totalorder %s79, %s93
    %p95 = scmp.eq.s32.totalorder %s15, 0
    %p96 = por %p94, %p95
    %s97 = ssub.s32 %s16, %s28
    %s98 = ssub.s32 %s17, %s24
    %s99 = sor.u32 %s97, %s98
    %p100 = scmp.eq.s32.totalorder %s99, 0
    %s102 = sadd.s32 %s101, 1
    %s103 = scalar_select %p100, %s101, %s102
    %p106 = pneg %p100
    %p107 = scmp.eq.s32.totalorder %s9, 3
    %p108 = por %p106, %p107
    %p109 = scmp.ne.s32.totalorder %s101, %s104
    %p110 = scmp.eq.s32.totalorder %s9, 0
    %p111 = por %p109, %p110
    %p112 = scmp.ne.s32.totalorder %s101, %s104
    %p113 = scmp.eq.s32.totalorder %s14, 3
    %p114 = por %p112, %p113
    %p115 = scmp.ne.s32.totalorder %s104, %s105
    %p116 = scmp.eq.s32.totalorder %s14, 0
    %p117 = por %p115, %p116
    %p118 = scmp.ne.s32.totalorder %s104, %s105
    %p119 = scmp.eq.s32.totalorder %s15, 3
    %p120 = por %p118, %p119
    %p122 = scmp.ne.s32.totalorder %s105, %s121
    %p123 = scmp.eq.s32.totalorder %s15, 0
    %p124 = por %p122, %p123
    %p125 = scmp.le.s32.totalorder 1, %s9
    %p126 = scmp.lt.s32.totalorder %s9, 5
    %p127 = pnand %p125, %p126
    %p128 = pneg %p127
    // Predicated region
    $region9: #{conv3x3x3_bn_relu.1} parent=5 // pred_check
      _
    $region10: #{conv3x3x3_bn_relu.1} parent=5 // pred_check_branch
      %130 = sbr.rel (%p127) target = $region12
    $region11: #{conv3x3x3_bn_relu.1} parent=5 // pred_region
      %s131 = ssub.s32 %s9, 1
      // Predicated region
      $region13: #{conv3x3x3_bn_relu.1} parent=11 // pred_check
        %p132 = pneg %p68
      $region14: #{conv3x3x3_bn_relu.1} parent=11 // pred_check_branch
        %134 = sbr.rel (%p132) target = $region16
      $region15: #{conv3x3x3_bn_relu.1} parent=11 // pred_region
        _
      $region16: #{conv3x3x3_bn_relu.1} parent=11 // pred_fallthru
        _
      // Predicated region
      $region17: #{conv3x3x3_bn_relu.1} parent=11 // pred_check
        %p135 = pneg %p89
      $region18: #{conv3x3x3_bn_relu.1} parent=11 // pred_check_branch
        %137 = sbr.rel (%p135) target = $region20
      $region19: #{conv3x3x3_bn_relu.1} parent=11 // pred_region
        _
      $region20: #{conv3x3x3_bn_relu.1} parent=11 // pred_fallthru
        _
    $region12: #{conv3x3x3_bn_relu.1} parent=5 // pred_fallthru
      _
    %p138 = scmp.lt.s32.totalorder %s9, 4
    // Predicated region
    $region21: #{conv3x3x3_bn_relu.1} parent=5 // pred_check
      %p139 = pneg %p138
    $region22: #{conv3x3x3_bn_relu.1} parent=5 // pred_check_branch
      %141 = sbr.rel (%p139) target = $region24
    $region23: #{conv3x3x3_bn_relu.1} parent=5 // pred_region
      // Predicated region
      $region25: #{conv3x3x3_bn_relu.1} parent=23 // pred_check
        %p142 = pneg %p41
      $region26: #{conv3x3x3_bn_relu.1} parent=23 // pred_check_branch
        %144 = sbr.rel (%p142) target = $region28
      $region27: #{conv3x3x3_bn_relu.1} parent=23 // pred_region
        %p145 = scmp.lt.s32.totalorder %s16, 1
        %s146 = scalar_select %p145, %s16, 1
        %s147 = smul.addr %s146, 30
        %s148 = smul.addr %s147, 4
        %s149 = scalar_lea.vmem %s0, %s148
      $region28: #{conv3x3x3_bn_relu.1} parent=23 // pred_fallthru
        _
    $region24: #{conv3x3x3_bn_relu.1} parent=5 // pred_fallthru
      _
    %p150 = scmp.le.s32.totalorder 1, %s9
    %p151 = scmp.lt.s32.totalorder %s9, 5
    %p152 = pnand %p150, %p151
    %p153 = pneg %p152
    // Predicated region
    $region29: #{conv3x3x3_bn_relu.1} parent=5 // pred_check
      _
    $region30: #{conv3x3x3_bn_relu.1} parent=5 // pred_check_branch
      %155 = sbr.rel (%p152) target = $region32
    $region31: #{conv3x3x3_bn_relu.1} parent=5 // pred_region
      %s156 = ssub.s32 %s9, 1
      %p157 = scmp.lt.s32.totalorder %s18, 1
      %s158 = scalar_select %p157, %s18, 1
      %s159 = smul.addr %s158, 30
      %s160 = smul.addr %s159, 4
      %s161 = scalar_lea.vmem %s0, %s160
      %p162 = pneg %p47
      %p163 = pneg %p44
      %p164 = pneg %p68
      %p165 = pneg %p65
      %p166 = pneg %p89
      %p167 = pneg %p86
      %p168 = pneg %p117
      %p169 = pneg %p114
      %s170 = smul.u32 4, %s19
      %p171 = scmp.lt.s32.totalorder %s18, 1
      %s172 = scalar_select %p171, %s18, 1
      %p173 = scmp.lt.s32.totalorder %s170, 7
      %s174 = scalar_select %p173, %s170, 7
      %s175 = smul.addr %s174, 2
      %s176 = smul.addr %s172, 16
      %s177 = sadd.s32 %s175, %s176
      %s178 = smul.addr %s177, 8
      %s179 = scalar_lea.vmem %s3, %s178
      %p180 = scmp.lt.s32.totalorder %s18, 1
      %s181 = scalar_select %p180, %s18, 1
      %s182 = smul.addr %s181, 30
      %s183 = smul.addr %s182, 4
      %s184 = scalar_lea.vmem %s0, %s183
      %s185 = smul.u32 4, %s19
      %p186 = scmp.lt.s32.totalorder %s18, 1
      %s187 = scalar_select %p186, %s18, 1
      %p188 = scmp.lt.s32.totalorder %s185, 7
      %s189 = scalar_select %p188, %s185, 7
      %s190 = smul.addr %s189, 2
      %s191 = smul.addr %s187, 16
      %s192 = sadd.s32 %s190, %s191
      %s193 = smul.addr %s192, 8
      %s194 = scalar_lea.vmem %s3, %s193
      %s195 = smul.u32 4, %s19
      %s197 = smul.u32 %s19, 4
      %v198 = vld [vmem:[%s2] sm:$0x1]
      %v200 = vlaneseq
      %v201 = vshrl.u32 %v200, 7
      %v202 = vsub.s32 0, %v201
      %v203 = vrot.slane %v198, %v202
      %s205 = smul.u32 %s197, 3
      %s206 = smul.addr %s205, 4
      %s207 = scalar_lea.vmem %s184, %s206
      %v208 = vld [vmem:[%s207] sm:$0xf]
      %v209 = vld [vmem:[%s207 + $0x4] sm:$0xf]
      %v210 = vld [vmem:[%s207 + $0xc] sm:$0xf]
      %v211 = vld [vmem:[%s207 + $0x10] sm:$0xf]
      %v212 = vld [vmem:[%s207 + $0x18] sm:$0xf]
      %v213 = vld [vmem:[%s207 + $0x1c] sm:$0xf]
      %v214 = vld [vmem:[%s207 + $0x24] sm:$0xf]
      %v215 = vld [vmem:[%s207 + $0x28] sm:$0xf]
      %v216 = vld [vmem:[%s207 + $0x8] sm:$0x1]
      %v217 = vld [vmem:[%s207 + $0x14] sm:$0x1]
      %v218 = vld [vmem:[%s207 + $0x20] sm:$0x1]
      %v219 = vld [vmem:[%s207 + $0x2c] sm:$0x1]
      %vm220 = vsmask.f32 3328
      %vm221 = vsmask.f32 7440
      %vm222 = vmor %vm220, %vm221
      %v224 = vshrl.u32 %v208, 16
      %v226 = vrot.slane %v224, 4
      %v227 = vshll.u32 %v208, 16
      %v229 = vrot.slane %v227, 5
      %v230 = vor.u32 %v226, %v229
      %v231 = vrot.slane %v230, 4
      %v233 = vshll.u32 %v209, 16
      %v235 = vrot.slane %v233, 5
      %v236 = vsel %vm222, %v231, %v235
      %v237 = vshrl.u32 %v209, 16
      %v239 = vrot.slane %v237, 4
      %v240 = vor.u32 %v239, %v235
      %v241 = vrot.slane %v240, 4
      %v243 = vshll.u32 %v216, 16
      %v245 = vrot.slane %v243, 5
      %v246 = vsel %vm222, %v241, %v245
      %v248 = vshrl.u32 %v210, 16
      %v250 = vrot.slane %v248, 4
      %v251 = vshll.u32 %v210, 16
      %v253 = vrot.slane %v251, 5
      %v254 = vor.u32 %v250, %v253
      %v255 = vrot.slane %v254, 4
      %v257 = vshll.u32 %v211, 16
      %v259 = vrot.slane %v257, 5
      %v260 = vsel %vm222, %v255, %v259
      %v261 = vshrl.u32 %v211, 16
      %v263 = vrot.slane %v261, 4
      %v264 = vor.u32 %v263, %v259
      %v265 = vrot.slane %v264, 4
      %v267 = vshll.u32 %v217, 16
      %v269 = vrot.slane %v267, 5
      %v270 = vsel %vm222, %v265, %v269
      %v272 = vshrl.u32 %v212, 16
      %v274 = vrot.slane %v272, 4
      %v275 = vshll.u32 %v212, 16
      %v277 = vrot.slane %v275, 5
      %v278 = vor.u32 %v274, %v277
      %v279 = vrot.slane %v278, 4
      %v281 = vshll.u32 %v213, 16
      %v283 = vrot.slane %v281, 5
      %v284 = vsel %vm222, %v279, %v283
      %v285 = vshrl.u32 %v213, 16
      %v287 = vrot.slane %v285, 4
      %v288 = vor.u32 %v287, %v283
      %v289 = vrot.slane %v288, 4
      %v291 = vshll.u32 %v218, 16
      %v293 = vrot.slane %v291, 5
      %v294 = vsel %vm222, %v289, %v293
      %v296 = vshrl.u32 %v214, 16
      %v298 = vrot.slane %v296, 4
      %v299 = vshll.u32 %v214, 16
      %v301 = vrot.slane %v299, 5
      %v302 = vor.u32 %v298, %v301
      %v303 = vrot.slane %v302, 4
      %v305 = vshll.u32 %v215, 16
      %v307 = vrot.slane %v305, 5
      %v308 = vsel %vm222, %v303, %v307
      %v309 = vshrl.u32 %v215, 16
      %v311 = vrot.slane %v309, 4
      %v312 = vor.u32 %v311, %v307
      %v313 = vrot.slane %v312, 4
      %v315 = vshll.u32 %v219, 16
      %v317 = vrot.slane %v315, 5
      %v318 = vsel %vm222, %v313, %v317
      %v319 = vld [vmem:[%s207] sm:$0xe]
      %v320 = vld [vmem:[%s207 + $0xc] sm:$0xe]
      %v321 = vld [vmem:[%s207 + $0x18] sm:$0xe]
      %v322 = vld [vmem:[%s207 + $0x24] sm:$0xe]
      %vm335 = vcmask 1042432
      %vm336 = vcmask 1046532
      %vm337 = vmor %vm335, %vm336
      %v338 = vrot.slane %v319, 5
      %v339 = vrot.slane %v338, 4
      %v340 = vrot.slane %v209, 5
      %v341 = vsel %vm337, %v339, %v340
      %v342 = vrot.slane %v340, 4
      %v343 = vrot.slane %v216, 5
      %v344 = vsel %vm337, %v342, %v343
      %v345 = vrot.slane %v320, 5
      %v346 = vrot.slane %v345, 4
      %v347 = vrot.slane %v211, 5
      %v348 = vsel %vm337, %v346, %v347
      %v349 = vrot.slane %v347, 4
      %v350 = vrot.slane %v217, 5
      %v351 = vsel %vm337, %v349, %v350
      %v352 = vrot.slane %v321, 5
      %v353 = vrot.slane %v352, 4
      %v354 = vrot.slane %v213, 5
      %v355 = vsel %vm337, %v353, %v354
      %v356 = vrot.slane %v354, 4
      %v357 = vrot.slane %v218, 5
      %v358 = vsel %vm337, %v356, %v357
      %v359 = vrot.slane %v322, 5
      %v360 = vrot.slane %v359, 4
      %v361 = vrot.slane %v215, 5
      %v362 = vsel %vm337, %v360, %v361
      %v363 = vrot.slane %v361, 4
      %v364 = vrot.slane %v219, 5
      %v365 = vsel %vm337, %v363, %v364
      %v370 = vunpack.c.l.b16 %v208
      %v371 = vunpack.c.l.b16 %v209
      %v372 = vunpack.c.l.b16 %v210
      %v373 = vunpack.c.l.b16 %v211
      %v374 = vunpack.c.l.b16 %v212
      %v375 = vunpack.c.l.b16 %v213
      %v376 = vunpack.c.l.b16 %v214
      %v377 = vunpack.c.l.b16 %v215
      %v378 = vpack.c.b16 %v371, %v370
      %v379 = vpack.c.b16 %v373, %v372
      %v380 = vpack.c.b16 %v375, %v374
      %v381 = vpack.c.b16 %v377, %v376
      %v382 = vunpack.c.l.b16 %v236
      %v383 = vunpack.c.l.b16 %v246
      %v384 = vunpack.c.l.b16 %v260
      %v385 = vunpack.c.l.b16 %v270
      %v386 = vunpack.c.l.b16 %v284
      %v387 = vunpack.c.l.b16 %v294
      %v388 = vunpack.c.l.b16 %v308
      %v389 = vunpack.c.l.b16 %v318
      %v390 = vpack.c.b16 %v383, %v382
      %v391 = vpack.c.b16 %v385, %v384
      %v392 = vpack.c.b16 %v387, %v386
      %v393 = vpack.c.b16 %v389, %v388
      %394 = vrot.lane.b32.xlu0 %v390, 64
      %v395 = vpop.permute.xlu0 %394
      %396 = vrot.lane.b32.xlu0 %v391, 64
      %v397 = vpop.permute.xlu0 %396
      %398 = vrot.lane.b32.xlu0 %v392, 64
      %v399 = vpop.permute.xlu0 %398
      %400 = vrot.lane.b32.xlu0 %v393, 64
      %v401 = vpop.permute.xlu0 %400
      %v402 = vunpack.c.l.b16 %v341
      %v403 = vunpack.c.l.b16 %v344
      %v404 = vunpack.c.l.b16 %v348
      %v405 = vunpack.c.l.b16 %v351
      %v406 = vunpack.c.l.b16 %v355
      %v407 = vunpack.c.l.b16 %v358
      %v408 = vunpack.c.l.b16 %v362
      %v409 = vunpack.c.l.b16 %v365
      %v410 = vpack.c.b16 %v403, %v402
      %v411 = vpack.c.b16 %v405, %v404
      %v412 = vpack.c.b16 %v407, %v406
      %v413 = vpack.c.b16 %v409, %v408
      %vm414 = vcmask 523264
      %v417 = vsel %vm414, %v378, %v395
      %v421 = vsel %vm414, %v379, %v397
      %v425 = vsel %vm414, %v380, %v399
      %v429 = vsel %vm414, %v381, %v401
      %v431 = vld [vmem:[%s1] sm:$0xf]
      %v432 = vld [vmem:[%s1 + $0x4] sm:$0xf]
      %v433 = vld [vmem:[%s1 + $0x8] sm:$0xf]
      %v434 = vld [vmem:[%s1 + $0xc] sm:$0xf]
      %v435 = vld [vmem:[%s1 + $0x10] sm:$0xf]
      %v436 = vld [vmem:[%s1 + $0x14] sm:$0xf]
      %v437 = vld [vmem:[%s1 + $0x18] sm:$0xf]
      %v438 = vld [vmem:[%s1 + $0x1c] sm:$0xf]
      %v439 = vld [vmem:[%s1 + $0x20] sm:$0xf]
      %v440 = vld [vmem:[%s1 + $0x24] sm:$0xf]
      %v441 = vld [vmem:[%s1 + $0x28] sm:$0xf]
      %v442 = vld [vmem:[%s1 + $0x2c] sm:$0xf]
      %v443 = vld [vmem:[%s1 + $0x30] sm:$0xf]
      %v444 = vld [vmem:[%s1 + $0x34] sm:$0xf]
      %v445 = vld [vmem:[%s1 + $0x38] sm:$0xf]
      %v446 = vld [vmem:[%s1 + $0x3c] sm:$0xf]
      %v447 = vld [vmem:[%s1 + $0x40] sm:$0xf]
      %v448 = vld [vmem:[%s1 + $0x44] sm:$0xf]
      %v449 = vld [vmem:[%s1 + $0x48] sm:$0xf]
      %v450 = vld [vmem:[%s1 + $0x4c] sm:$0xf]
      %v451 = vld [vmem:[%s1 + $0x50] sm:$0xf]
      %v452 = vld [vmem:[%s1 + $0x54] sm:$0xf]
      %v453 = vld [vmem:[%s1 + $0x58] sm:$0xf]
      %v454 = vld [vmem:[%s1 + $0x5c] sm:$0xf]
      %v479 = vunpack.c.l.b16 %v431
      %v480 = vunpack.c.l.b16 %v432
      %v481 = vunpack.c.l.b16 %v433
      %v482 = vunpack.c.l.b16 %v434
      %v483 = vunpack.c.l.b16 %v435
      %v484 = vunpack.c.l.b16 %v436
      %v485 = vunpack.c.l.b16 %v437
      %v486 = vunpack.c.l.b16 %v438
      %v487 = vunpack.c.l.b16 %v439
      %v488 = vunpack.c.l.b16 %v440
      %v489 = vunpack.c.l.b16 %v441
      %v490 = vunpack.c.l.b16 %v442
      %v491 = vunpack.c.l.b16 %v443
      %v492 = vunpack.c.l.b16 %v444
      %v493 = vunpack.c.l.b16 %v445
      %v494 = vunpack.c.l.b16 %v446
      %v495 = vunpack.c.l.b16 %v447
      %v496 = vunpack.c.l.b16 %v448
      %v497 = vunpack.c.l.b16 %v449
      %v498 = vunpack.c.l.b16 %v450
      %v499 = vunpack.c.l.b16 %v451
      %v500 = vunpack.c.l.b16 %v452
      %v501 = vunpack.c.l.b16 %v453
      %v502 = vunpack.c.l.b16 %v454
      %v503 = vpack.c.b16 %v480, %v479
      %v504 = vpack.c.b16 %v482, %v481
      %v505 = vpack.c.b16 %v484, %v483
      %v506 = vpack.c.b16 %v486, %v485
      %v507 = vpack.c.b16 %v488, %v487
      %v508 = vpack.c.b16 %v490, %v489
      %v509 = vpack.c.b16 %v492, %v491
      %v510 = vpack.c.b16 %v494, %v493
      %v511 = vpack.c.b16 %v496, %v495
      %v512 = vpack.c.b16 %v498, %v497
      %v513 = vpack.c.b16 %v500, %v499
      %v514 = vpack.c.b16 %v502, %v501
      %v528 = vsel %vm414, %v410, 0
      %v531 = vsel %vm414, %v411, 0
      %v534 = vsel %vm414, %v412, 0
      %v537 = vsel %vm414, %v413, 0
      %539 = vmatprep.subr.bf16.mxu0 0
      %540 = vmatpush1.bf16.msra.mxu0 %v503
      %541 = vmatprep.subr.bf16.mxu0 0
      %542 = vmatpush1.bf16.msra.mxu0 %v504
      %543 = vmatprep.subr.bf16.mxu0 0
      %544 = vmatpush1.bf16.msra.mxu0 %v505
      %545 = vmatprep.subr.bf16.mxu0 0
      %546 = vmatpush1.bf16.msra.mxu0 %v506
      %547 = vmatprep.subr.bf16.mxu0 0
      %548 = vmatpush1.bf16.msra.mxu0 %v507
      %549 = vmatprep.subr.bf16.mxu0 0
      %550 = vmatpush1.bf16.msra.mxu0 %v508
      %551 = vmatprep.subr.bf16.mxu0 0
      %552 = vmatpush1.bf16.msra.mxu0 %v509
      %553 = vmatprep.subr.bf16.mxu0 0
      %554 = vmatpush1.bf16.msra.mxu0 %v510
      %555 = vmatprep.subr.bf16.mxu0 0
      %556 = vmatpush1.bf16.msra.mxu0 %v511
      %557 = vmatprep.subr.bf16.mxu0 0
      %558 = vmatpush1.bf16.msra.mxu0 %v512
      %559 = vmatprep.subr.bf16.mxu0 0
      %560 = vmatpush1.bf16.msra.mxu0 %v513
      %561 = vmatprep.subr.bf16.mxu0 0
      %562 = vmatpush1.bf16.msra.mxu0 %v514
      %563 = vmatprep.subr.bf16.mxu0 0
      %564 = vmatpush1.bf16.msra.mxu0 0
      %565 = vmatprep.subr.bf16.mxu0 0
      %566 = vmatpush1.bf16.msra.mxu0 0
      %567 = vmatprep.subr.bf16.mxu0 0
      %568 = vmatpush1.bf16.msra.mxu0 0
      %569 = vmatprep.subr.bf16.mxu0 0
      %570 = vmatpush1.bf16.msra.mxu0 0
      %571 = vmatprep.mubr.bf16.mxu0 %v528
      %572 = vmatmul.mubr.bf16.gmra.mrb[0].mxu0 %v417
      %v573 = vpop.f32.mrb[0].mxu0
      %v574 = vadd.f32 0.0, %v573
      %v575 = vpop.f32.mrb[0].mxu0
      %v576 = vpop.f32.mrb[0].mxu0
      %v577 = vadd.f32 0.0, %v576
      %v578 = vpop.f32.mrb[0].mxu0
      %579 = vmatprep.mubr.bf16.mxu0 %v531
      %580 = vmatmul.mubr.bf16.gmra.mrb[0].mxu0 %v421
      %v581 = vpop.f32.mrb[0].mxu0
      %v582 = vadd.f32 0.0, %v581
      %v583 = vpop.f32.mrb[0].mxu0
      %v584 = vpop.f32.mrb[0].mxu0
      %v585 = vadd.f32 0.0, %v584
      %v586 = vpop.f32.mrb[0].mxu0
      %587 = vmatprep.mubr.bf16.mxu0 %v534
      %588 = vmatmul.mubr.bf16.gmra.mrb[0].mxu0 %v425
      %v589 = vpop.f32.mrb[0].mxu0
      %v590 = vadd.f32 0.0, %v589
      %v591 = vpop.f32.mrb[0].mxu0
      %v592 = vpop.f32.mrb[0].mxu0
      %v593 = vadd.f32 0.0, %v592
      %v594 = vpop.f32.mrb[0].mxu0
      %595 = vmatprep.mubr.bf16.mxu0 %v537
      %596 = vmatmul.mubr.bf16.gmra.mrb[0].mxu0 %v429
      %v597 = vpop.f32.mrb[0].mxu0
      %v598 = vadd.f32 0.0, %v597
      %v599 = vpop.f32.mrb[0].mxu0
      %v600 = vpop.f32.mrb[0].mxu0
      %v601 = vadd.f32 0.0, %v600
      %v602 = vpop.f32.mrb[0].mxu0
      %603 = vdwg.mxu0
      %v604 = vadd.f32 %v203, %v574
      %v605 = vadd.f32 %v203, %v577
      %v606 = vadd.f32 %v203, %v582
      %v607 = vadd.f32 %v203, %v585
      %v608 = vadd.f32 %v203, %v590
      %v609 = vadd.f32 %v203, %v593
      %v610 = vadd.f32 %v203, %v598
      %v611 = vadd.f32 %v203, %v601
      %s612 = sadd.s32 %s197, 1
      %s613 = smul.u32 %s612, 3
      %s614 = smul.addr %s613, 4
      %s615 = scalar_lea.vmem %s184, %s614
      %v616 = vld [vmem:[%s615] sm:$0xf]
      %v617 = vld [vmem:[%s615 + $0x4] sm:$0xf]
      %v618 = vld [vmem:[%s615 + $0xc] sm:$0xf]
      %v619 = vld [vmem:[%s615 + $0x10] sm:$0xf]
      %v620 = vld [vmem:[%s615 + $0x18] sm:$0xf]
      %v621 = vld [vmem:[%s615 + $0x1c] sm:$0xf]
      %v622 = vld [vmem:[%s615 + $0x24] sm:$0xf]
      %v623 = vld [vmem:[%s615 + $0x28] sm:$0xf]
      %v624 = vld [vmem:[%s615 + $0x8] sm:$0x1]
      %v625 = vld [vmem:[%s615 + $0x14] sm:$0x1]
      %v626 = vld [vmem:[%s615 + $0x20] sm:$0x1]
      %v627 = vld [vmem:[%s615 + $0x2c] sm:$0x1]
      %v629 = vshrl.u32 %v616, 16
      %v631 = vrot.slane %v629, 4
      %v632 = vshll.u32 %v616, 16
      %v634 = vrot.slane %v632, 5
      %v635 = vor.u32 %v631, %v634
      %v636 = vrot.slane %v635, 4
      %v638 = vshll.u32 %v617, 16
      %v640 = vrot.slane %v638, 5
      %v641 = vsel %vm222, %v636, %v640
      %v642 = vshrl.u32 %v617, 16
      %v644 = vrot.slane %v642, 4
      %v645 = vor.u32 %v644, %v640
      %v646 = vrot.slane %v645, 4
      %v648 = vshll.u32 %v624, 16
      %v650 = vrot.slane %v648, 5
      %v651 = vsel %vm222, %v646, %v650
      %v653 = vshrl.u32 %v618, 16
      %v655 = vrot.slane %v653, 4
      %v656 = vshll.u32 %v618, 16
      %v658 = vrot.slane %v656, 5
      %v659 = vor.u32 %v655, %v658
      %v660 = vrot.slane %v659, 4
      %v662 = vshll.u32 %v619, 16
      %v664 = vrot.slane %v662, 5
      %v665 = vsel %vm222, %v660, %v664
      %v666 = vshrl.u32 %v619, 16
      %v668 = vrot.slane %v666, 4
      %v669 = vor.u32 %v668, %v664
      %v670 = vrot.slane %v669, 4
      %v672 = vshll.u32 %v625, 16
      %v674 = vrot.slane %v672, 5
      %v675 = vsel %vm222, %v670, %v674
      %v677 = vshrl.u32 %v620, 16
      %v679 = vrot.slane %v677, 4
      %v680 = vshll.u32 %v620, 16
      %v682 = vrot.slane %v680, 5
      %v683 = vor.u32 %v679, %v682
      %v684 = vrot.slane %v683, 4
      %v686 = vshll.u32 %v621, 16
      %v688 = vrot.slane %v686, 5
      %v689 = vsel %vm222, %v684, %v688
      %v690 = vshrl.u32 %v621, 16
      %v692 = vrot.slane %v690, 4
      %v693 = vor.u32 %v692, %v688
      %v694 = vrot.slane %v693, 4
      %v696 = vshll.u32 %v626, 16
      %v698 = vrot.slane %v696, 5
      %v699 = vsel %vm222, %v694, %v698
      %v701 = vshrl.u32 %v622, 16
      %v703 = vrot.slane %v701, 4
      %v704 = vshll.u32 %v622, 16
      %v706 = vrot.slane %v704, 5
      %v707 = vor.u32 %v703, %v706
      %v708 = vrot.slane %v707, 4
      %v710 = vshll.u32 %v623, 16
      %v712 = vrot.slane %v710, 5
      %v713 = vsel %vm222, %v708, %v712
      %v714 = vshrl.u32 %v623, 16
      %v716 = vrot.slane %v714, 4
      %v717 = vor.u32 %v716, %v712
      %v718 = vrot.slane %v717, 4
      %v720 = vshll.u32 %v627, 16
      %v722 = vrot.slane %v720, 5
      %v723 = vsel %vm222, %v718, %v722
      %v724 = vld [vmem:[%s615] sm:$0xe]
      %v725 = vld [vmem:[%s615 + $0xc] sm:$0xe]
      %v726 = vld [vmem:[%s615 + $0x18] sm:$0xe]
      %v727 = vld [vmem:[%s615 + $0x24] sm:$0xe]
      %v740 = vrot.slane %v724, 5
      %v741 = vrot.slane %v740, 4
      %v742 = vrot.slane %v617, 5
      %v743 = vsel %vm337, %v741, %v742
      %v744 = vrot.slane %v742, 4
      %v745 = vrot.slane %v624, 5
      %v746 = vsel %vm337, %v744, %v745
      %v747 = vrot.slane %v725, 5
      %v748 = vrot.slane %v747, 4
      %v749 = vrot.slane %v619, 5
      %v750 = vsel %vm337, %v748, %v749
      %v751 = vrot.slane %v749, 4
      %v752 = vrot.slane %v625, 5
      %v753 = vsel %vm337, %v751, %v752
      %v754 = vrot.slane %v726, 5
      %v755 = vrot.slane %v754, 4
      %v756 = vrot.slane %v621, 5
      %v757 = vsel %vm337, %v755, %v756
      %v758 = vrot.slane %v756, 4
      %v759 = vrot.slane %v626, 5
      %v760 = vsel %vm337, %v758, %v759
      %v761 = vrot.slane %v727, 5
      %v762 = vrot.slane %v761, 4
      %v763 = vrot.slane %v623, 5
      %v764 = vsel %vm337, %v762, %v763
      %v765 = vrot.slane %v763, 4
      %v766 = vrot.slane %v627, 5
      %v767 = vsel %vm337, %v765, %v766
      %v772 = vunpack.c.l.b16 %v616
      %v773 = vunpack.c.l.b16 %v617
      %v774 = vunpack.c.l.b16 %v618
      %v775 = vunpack.c.l.b16 %v619
      %v776 = vunpack.c.l.b16 %v620
      %v777 = vunpack.c.l.b16 %v621
      %v778 = vunpack.c.l.b16 %v622
      %v779 = vunpack.c.l.b16 %v623
      %v780 = vpack.c.b16 %v773, %v772
      %v781 = vpack.c.b16 %v775, %v774
      %v782 = vpack.c.b16 %v777, %v776
      %v783 = vpack.c.b16 %v779, %v778
      %v784 = vunpack.c.l.b16 %v641
      %v785 = vunpack.c.l.b16 %v651
      %v786 = vunpack.c.l.b16 %v665
      %v787 = vunpack.c.l.b16 %v675
      %v788 = vunpack.c.l.b16 %v689
      %v789 = vunpack.c.l.b16 %v699
      %v790 = vunpack.c.l.b16 %v713
      %v791 = vunpack.c.l.b16 %v723
      %v792 = vpack.c.b16 %v785, %v784
      %v793 = vpack.c.b16 %v787, %v786
      %v794 = vpack.c.b16 %v789, %v788
      %v795 = vpack.c.b16 %v791, %v790
      %796 = vrot.lane.b32.xlu0 %v792, 64
      %v797 = vpop.permute.xlu0 %796
      %798 = vrot.lane.b32.xlu0 %v793, 64
      %v799 = vpop.permute.xlu0 %798
      %800 = vrot.lane.b32.xlu0 %v794, 64
      %v801 = vpop.permute.xlu0 %800
      %802 = vrot.lane.b32.xlu0 %v795, 64
      %v803 = vpop.permute.xlu0 %802
      %v804 = vunpack.c.l.b16 %v743
      %v805 = vunpack.c.l.b16 %v746
      %v806 = vunpack.c.l.b16 %v750
      %v807 = vunpack.c.l.b16 %v753
      %v808 = vunpack.c.l.b16 %v757
      %v809 = vunpack.c.l.b16 %v760
      %v810 = vunpack.c.l.b16 %v764
      %v811 = vunpack.c.l.b16 %v767
      %v812 = vpack.c.b16 %v805, %v804
      %v813 = vpack.c.b16 %v807, %v806
      %v814 = vpack.c.b16 %v809, %v808
      %v815 = vpack.c.b16 %v811, %v810
      %v818 = vsel %vm414, %v780, %v797
      %v822 = vsel %vm414, %v781, %v799
      %v826 = vsel %vm414, %v782, %v801
      %v830 = vsel %vm414, %v783, %v803
      %s832 = scalar_lea.vmem %s1, 96
      %v833 = vld [vmem:[%s832] sm:$0xf]
      %v834 = vld [vmem:[%s832 + $0x4] sm:$0xf]
      %v835 = vld [vmem:[%s832 + $0x8] sm:$0xf]
      %v836 = vld [vmem:[%s832 + $0xc] sm:$0xf]
      %v837 = vld [vmem:[%s832 + $0x10] sm:$0xf]
      %v838 = vld [vmem:[%s832 + $0x14] sm:$0xf]
      %v839 = vld [vmem:[%s832 + $0x18] sm:$0xf]
      %v840 = vld [vmem:[%s832 + $0x1c] sm:$0xf]
      %v841 = vld [vmem:[%s832 + $0x20] sm:$0xf]
      %v842 = vld [vmem:[%s832 + $0x24] sm:$0xf]
      %v843 = vld [vmem:[%s832 + $0x28] sm:$0xf]
      %v844 = vld [vmem:[%s832 + $0x2c] sm:$0xf]
      %v845 = vld [vmem:[%s832 + $0x30] sm:$0xf]
      %v846 = vld [vmem:[%s832 + $0x34] sm:$0xf]
      %v847 = vld [vmem:[%s832 + $0x38] sm:$0xf]
      %v848 = vld [vmem:[%s832 + $0x3c] sm:$0xf]
      %v849 = vld [vmem:[%s832 + $0x40] sm:$0xf]
      %v850 = vld [vmem:[%s832 + $0x44] sm:$0xf]
      %v851 = vld [vmem:[%s832 + $0x48] sm:$0xf]
      %v852 = vld [vmem:[%s832 + $0x4c] sm:$0xf]
      %v853 = vld [vmem:[%s832 + $0x50] sm:$0xf]
      %v854 = vld [vmem:[%s832 + $0x54] sm:$0xf]
      %v855 = vld [vmem:[%s832 + $0x58] sm:$0xf]
      %v856 = vld [vmem:[%s832 + $0x5c] sm:$0xf]
      %v881 = vunpack.c.l.b16 %v833
      %v882 = vunpack.c.l.b16 %v834
      %v883 = vunpack.c.l.b16 %v835
      %v884 = vunpack.c.l.b16 %v836
      %v885 = vunpack.c.l.b16 %v837
      %v886 = vunpack.c.l.b16 %v838
      %v887 = vunpack.c.l.b16 %v839
      %v888 = vunpack.c.l.b16 %v840
      %v889 = vunpack.c.l.b16 %v841
      %v890 = vunpack.c.l.b16 %v842
      %v891 = vunpack.c.l.b16 %v843
      %v892 = vunpack.c.l.b16 %v844
      %v893 = vunpack.c.l.b16 %v845
      %v894 = vunpack.c.l.b16 %v846
      %v895 = vunpack.c.l.b16 %v847
      %v896 = vunpack.c.l.b16 %v848
      %v897 = vunpack.c.l.b16 %v849
      %v898 = vunpack.c.l.b16 %v850
      %v899 = vunpack.c.l.b16 %v851
      %v900 = vunpack.c.l.b16 %v852
      %v901 = vunpack.c.l.b16 %v853
      %v902 = vunpack.c.l.b16 %v854
      %v903 = vunpack.c.l.b16 %v855
      %v904 = vunpack.c.l.b16 %v856
      %v905 = vpack.c.b16 %v882, %v881
      %v906 = vpack.c.b16 %v884, %v883
      %v907 = vpack.c.b16 %v886, %v885
      %v908 = vpack.c.b16 %v888, %v887
      %v909 = vpack.c.b16 %v890, %v889
      %v910 = vpack.c.b16 %v892, %v891
      %v911 = vpack.c.b16 %v894, %v893
      %v912 = vpack.c.b16 %v896, %v895
      %v913 = vpack.c.b16 %v898, %v897
      %v914 = vpack.c.b16 %v900, %v899
      %v915 = vpack.c.b16 %v902, %v901
      %v916 = vpack.c.b16 %v904, %v903
      %v930 = vsel %vm414, %v812, 0
      %v933 = vsel %vm414, %v813, 0
      %v936 = vsel %vm414, %v814, 0
      %v939 = vsel %vm414, %v815, 0
      %941 = vmatprep.subr.bf16.mxu0 0
      %942 = vmatpush1.bf16.msra.mxu0 %v905
      %943 = vmatprep.subr.bf16.mxu0 0
      %944 = vmatpush1.bf16.msra.mxu0 %v906
      %945 = vmatprep.subr.bf16.mxu0 0
      %946 = vmatpush1.bf16.msra.mxu0 %v907
      %947 = vmatprep.subr.bf16.mxu0 0
      %948 = vmatpush1.bf16.msra.mxu0 %v908
      %949 = vmatprep.subr.bf16.mxu0 0
      %950 = vmatpush1.bf16.msra.mxu0 %v909
      %951 = vmatprep.subr.bf16.mxu0 0
      %952 = vmatpush1.bf16.msra.mxu0 %v910
      %953 = vmatprep.subr.bf16.mxu0 0
      %954 = vmatpush1.bf16.msra.mxu0 %v911
      %955 = vmatprep.subr.bf16.mxu0 0
      %956 = vmatpush1.bf16.msra.mxu0 %v912
      %957 = vmatprep.subr.bf16.mxu0 0
      %958 = vmatpush1.bf16.msra.mxu0 %v913
      %959 = vmatprep.subr.bf16.mxu0 0
      %960 = vmatpush1.bf16.msra.mxu0 %v914
      %961 = vmatprep.subr.bf16.mxu0 0
      %962 = vmatpush1.bf16.msra.mxu0 %v915
      %963 = vmatprep.subr.bf16.mxu0 0
      %964 = vmatpush1.bf16.msra.mxu0 %v916
      %965 = vmatprep.subr.bf16.mxu0 0
      %966 = vmatpush1.bf16.msra.mxu0 0
      %967 = vmatprep.subr.bf16.mxu0 0
      %968 = vmatpush1.bf16.msra.mxu0 0
      %969 = vmatprep.subr.bf16.mxu0 0
      %970 = vmatpush1.bf16.msra.mxu0 0
      %971 = vmatprep.subr.bf16.mxu0 0
      %972 = vmatpush1.bf16.msra.mxu0 0
      %973 = vmatprep.mubr.bf16.mxu0 %v930
      %974 = vmatmul.mubr.bf16.gmra.mrb[0].mxu0 %v818
      %v975 = vpop.f32.mrb[0].mxu0
      %v976 = vadd.f32 0.0, %v975
      %v977 = vpop.f32.mrb[0].mxu0
      %v978 = vpop.f32.mrb[0].mxu0
      %v979 = vadd.f32 0.0, %v978
      %v980 = vpop.f32.mrb[0].mxu0
      %981 = vmatprep.mubr.bf16.mxu0 %v933
      %982 = vmatmul.mubr.bf16.gmra.mrb[0].mxu0 %v822
      %v983 = vpop.f32.mrb[0].mxu0
      %v984 = vadd.f32 0.0, %v983
      %v985 = vpop.f32.mrb[0].mxu0
      %v986 = vpop.f32.mrb[0].mxu0
      %v987 = vadd.f32 0.0, %v986
      %v988 = vpop.f32.mrb[0].mxu0
      %989 = vmatprep.mubr.bf16.mxu0 %v936
      %990 = vmatmul.mubr.bf16.gmra.mrb[0].mxu0 %v826
      %v991 = vpop.f32.mrb[0].mxu0
      %v992 = vadd.f32 0.0, %v991
      %v993 = vpop.f32.mrb[0].mxu0
      %v994 = vpop.f32.mrb[0].mxu0
      %v995 = vadd.f32 0.0, %v994
      %v996 = vpop.f32.mrb[0].mxu0
      %997 = vmatprep.mubr.bf16.mxu0 %v939
      %998 = vmatmul.mubr.bf16.gmra.mrb[0].mxu0 %v830
      %v999 = vpop.f32.mrb[0].mxu0
      %v1000 = vadd.f32 0.0, %v999
      %v1001 = vpop.f32.mrb[0].mxu0
      %v1002 = vpop.f32.mrb[0].mxu0
      %v1003 = vadd.f32 0.0, %v1002
      %v1004 = vpop.f32.mrb[0].mxu0
      %1005 = vdwg.mxu0
      %v1006 = vadd.f32 %v604, %v976
      %v1007 = vadd.f32 %v605, %v979
      %v1008 = vadd.f32 %v606, %v984
      %v1009 = vadd.f32 %v607, %v987
      %v1010 = vadd.f32 %v608, %v992
      %v1011 = vadd.f32 %v609, %v995
      %v1012 = vadd.f32 %v610, %v1000
      %v1013 = vadd.f32 %v611, %v1003
      %s1014 = sadd.s32 %s197, 2
      %s1015 = smul.u32 %s1014, 3
      %s1016 = smul.addr %s1015, 4
      %s1017 = scalar_lea.vmem %s184, %s1016
      %v1018 = vld [vmem:[%s1017] sm:$0xf]
      %v1019 = vld [vmem:[%s1017 + $0x4] sm:$0xf]
      %v1020 = vld [vmem:[%s1017 + $0xc] sm:$0xf]
      %v1021 = vld [vmem:[%s1017 + $0x10] sm:$0xf]
      %v1022 = vld [vmem:[%s1017 + $0x18] sm:$0xf]
      %v1023 = vld [vmem:[%s1017 + $0x1c] sm:$0xf]
      %v1024 = vld [vmem:[%s1017 + $0x24] sm:$0xf]
      %v1025 = vld [vmem:[%s1017 + $0x28] sm:$0xf]
      %v1026 = vld [vmem:[%s1017 + $0x8] sm:$0x1]
      %v1027 = vld [vmem:[%s1017 + $0x14] sm:$0x1]
      %v1028 = vld [vmem:[%s1017 + $0x20] sm:$0x1]
      %v1029 = vld [vmem:[%s1017 + $0x2c] sm:$0x1]
      %v1031 = vshrl.u32 %v1018, 16
      %v1033 = vrot.slane %v1031, 4
      %v1034 = vshll.u32 %v1018, 16
      %v1036 = vrot.slane %v1034, 5
      %v1037 = vor.u32 %v1033, %v1036
      %v1038 = vrot.slane %v1037, 4
      %v1040 = vshll.u32 %v1019, 16
      %v1042 = vrot.slane %v1040, 5
      %v1043 = vsel %vm222, %v1038, %v1042
      %v1044 = vshrl.u32 %v1019, 16
      %v1046 = vrot.slane %v1044, 4
      %v1047 = vor.u32 %v1046, %v1042
      %v1048 = vrot.slane %v1047, 4
      %v1050 = vshll.u32 %v1026, 16
      %v1052 = vrot.slane %v1050, 5
      %v1053 = vsel %vm222, %v1048, %v1052
      %v1055 = vshrl.u32 %v1020, 16
      %v1057 = vrot.slane %v1055, 4
      %v1058 = vshll.u32 %v1020, 16
      %v1060 = vrot.slane %v1058, 5
      %v1061 = vor.u32 %v1057, %v1060
      %v1062 = vrot.slane %v1061, 4
      %v1064 = vshll.u32 %v1021, 16
      %v1066 = vrot.slane %v1064, 5
      %v1067 = vsel %vm222, %v1062, %v1066
      %v1068 = vshrl.u32 %v1021, 16
      %v1070 = vrot.slane %v1068, 4
      %v1071 = vor.u32 %v1070, %v1066
      %v1072 = vrot.slane %v1071, 4
      %v1074 = vshll.u32 %v1027, 16
      %v1076 = vrot.slane %v1074, 5
      %v1077 = vsel %vm222, %v1072, %v1076
      %v1079 = vshrl.u32 %v1022, 16
      %v1081 = vrot.slane %v1079, 4
      %v1082 = vshll.u32 %v1022, 16
      %v1084 = vrot.slane %v1082, 5
      %v1085 = vor.u32 %v1081, %v1084
      %v1086 = vrot.slane %v1085, 4
      %v1088 = vshll.u32 %v1023, 16
      %v1090 = vrot.slane %v1088, 5
      %v1091 = vsel %vm222, %v1086, %v1090
      %v1092 = vshrl.u32 %v1023, 16
      %v1094 = vrot.slane %v1092, 4
      %v1095 = vor.u32 %v1094, %v1090
      %v1096 = vrot.slane %v1095, 4
      %v1098 = vshll.u32 %v1028, 16
      %v1100 = vrot.slane %v1098, 5
      %v1101 = vsel %vm222, %v1096, %v1100
      %v1103 = vshrl.u32 %v1024, 16
      %v1105 = vrot.slane %v1103, 4
      %v1106 = vshll.u32 %v1024, 16
      %v1108 = vrot.slane %v1106, 5
      %v1109 = vor.u32 %v1105, %v1108
      %v1110 = vrot.slane %v1109, 4
      %v1112 = vshll.u32 %v1025, 16
      %v1114 = vrot.slane %v1112, 5
      %v1115 = vsel %vm222, %v1110, %v1114
      %v1116 = vshrl.u32 %v1025, 16
      %v1118 = vrot.slane %v1116, 4
      %v1119 = vor.u32 %v1118, %v1114
      %v1120 = vrot.slane %v1119, 4
      %v1122 = vshll.u32 %v1029, 16
      %v1124 = vrot.slane %v1122, 5
      %v1125 = vsel %vm222, %v1120, %v1124
      %v1126 = vld [vmem:[%s1017] sm:$0xe]
      %v1127 = vld [vmem:[%s1017 + $0xc] sm:$0xe]
      %v1128 = vld [vmem:[%s1017 + $0x18] sm:$0xe]
      %v1129 = vld [vmem:[%s1017 + $0x24] sm:$0xe]
      %v1142 = vrot.slane %v1126, 5
      %v1143 = vrot.slane %v1142, 4
      %v1144 = vrot.slane %v1019, 5
      %v1145 = vsel %vm337, %v1143, %v1144
      %v1146 = vrot.slane %v1144, 4
      %v1147 = vrot.slane %v1026, 5
      %v1148 = vsel %vm337, %v1146, %v1147
      %v1149 = vrot.slane %v1127, 5
      %v1150 = vrot.slane %v1149, 4
      %v1151 = vrot.slane %v1021, 5
      %v1152 = vsel %vm337, %v1150, %v1151
      %v1153 = vrot.slane %v1151, 4
      %v1154 = vrot.slane %v1027, 5
      %v1155 = vsel %vm337, %v1153, %v1154
      %v1156 = vrot.slane %v1128, 5
      %v1157 = vrot.slane %v1156, 4
      %v1158 = vrot.slane %v1023, 5
      %v1159 = vsel %vm337, %v1157, %v1158
      %v1160 = vrot.slane %v1158, 4
      %v1161 = vrot.slane %v1028, 5
      %v1162 = vsel %vm337, %v1160, %v1161
      %v1163 = vrot.slane %v1129, 5
      %v1164 = vrot.slane %v1163, 4
      %v1165 = vrot.slane %v1025, 5
      %v1166 = vsel %vm337, %v1164, %v1165
      %v1167 = vrot.slane %v1165, 4
      %v1168 = vrot.slane %v1029, 5
      %v1169 = vsel %vm337, %v1167, %v1168
      %v1174 = vunpack.c.l.b16 %v1018
      %v1175 = vunpack.c.l.b16 %v1019
      %v1176 = vunpack.c.l.b16 %v1020
      %v1177 = vunpack.c.l.b16 %v1021
      %v1178 = vunpack.c.l.b16 %v1022
      %v1179 = vunpack.c.l.b16 %v1023
      %v1180 = vunpack.c.l.b16 %v1024
      %v1181 = vunpack.c.l.b16 %v1025
      %v1182 = vpack.c.b16 %v1175, %v1174
      %v1183 = vpack.c.b16 %v1177, %v1176
      %v1184 = vpack.c.b16 %v1179, %v1178
      %v1185 = vpack.c.b16 %v1181, %v1180
      %v1186 = vunpack.c.l.b16 %v1043
      %v1187 = vunpack.c.l.b16 %v1053
      %v1188 = vunpack.c.l.b16 %v1067
      %v1189 = vunpack.c.l.b16 %v1077
      %v1190 = vunpack.c.l.b16 %v1091
      %v1191 = vunpack.c.l.b16 %v1101
      %v1192 = vunpack.c.l.b16 %v1115
      %v1193 = vunpack.c.l.b16 %v1125
      %v1194 = vpack.c.b16 %v1187, %v1186
      %v1195 = vpack.c.b16 %v1189, %v1188
      %v1196 = vpack.c.b16 %v1191, %v1190
      %v1197 = vpack.c.b16 %v1193, %v1192
      %1198 = vrot.lane.b32.xlu0 %v1194, 64
      %v1199 = vpop.permute.xlu0 %1198
      %1200 = vrot.lane.b32.xlu0 %v1195, 64
      %v1201 = vpop.permute.xlu0 %1200
      %1202 = vrot.lane.b32.xlu0 %v1196, 64
      %v1203 = vpop.permute.xlu0 %1202
      %1204 = vrot.lane.b32.xlu0 %v1197, 64
      %v1205 = vpop.permute.xlu0 %1204
      %v1206 = vunpack.c.l.b16 %v1145
      %v1207 = vunpack.c.l.b16 %v1148
      %v1208 = vunpack.c.l.b16 %v1152
      %v1209 = vunpack.c.l.b16 %v1155
      %v1210 = vunpack.c.l.b16 %v1159
      %v1211 = vunpack.c.l.b16 %v1162
      %v1212 = vunpack.c.l.b16 %v1166
      %v1213 = vunpack.c.l.b16 %v1169
      %v1214 = vpack.c.b16 %v1207, %v1206
      %v1215 = vpack.c.b16 %v1209, %v1208
      %v1216 = vpack.c.b16 %v1211, %v1210
      %v1217 = vpack.c.b16 %v1213, %v1212
      %v1220 = vsel %vm414, %v1182, %v1199
      %v1224 = vsel %vm414, %v1183, %v1201
      %v1228 = vsel %vm414, %v1184, %v1203
      %v1232 = vsel %vm414, %v1185, %v1205
      %s1234 = scalar_lea.vmem %s1, 192
      %v1235 = vld [vmem:[%s1234] sm:$0xf]
      %v1236 = vld [vmem:[%s1234 + $0x4] sm:$0xf]
      %v1237 = vld [vmem:[%s1234 + $0x8] sm:$0xf]
      %v1238 = vld [vmem:[%s1234 + $0xc] sm:$0xf]
      %v1239 = vld [vmem:[%s1234 + $0x10] sm:$0xf]
      %v1240 = vld [vmem:[%s1234 + $0x14] sm:$0xf]
      %v1241 = vld [vmem:[%s1234 + $0x18] sm:$0xf]
      %v1242 = vld [vmem:[%s1234 + $0x1c] sm:$0xf]
      %v1243 = vld [vmem:[%s1234 + $0x20] sm:$0xf]
      %v1244 = vld [vmem:[%s1234 + $0x24] sm:$0xf]
      %v1245 = vld [vmem:[%s1234 + $0x28] sm:$0xf]
      %v1246 = vld [vmem:[%s1234 + $0x2c] sm:$0xf]
      %v1247 = vld [vmem:[%s1234 + $0x30] sm:$0xf]
      %v1248 = vld [vmem:[%s1234 + $0x34] sm:$0xf]
      %v1249 = vld [vmem:[%s1234 + $0x38] sm:$0xf]
      %v1250 = vld [vmem:[%s1234 + $0x3c] sm:$0xf]
      %v1251 = vld [vmem:[%s1234 + $0x40] sm:$0xf]
      %v1252 = vld [vmem:[%s1234 + $0x44] sm:$0xf]
      %v1253 = vld [vmem:[%s1234 + $0x48] sm:$0xf]
      %v1254 = vld [vmem:[%s1234 + $0x4c] sm:$0xf]
      %v1255 = vld [vmem:[%s1234 + $0x50] sm:$0xf]
      %v1256 = vld [vmem:[%s1234 + $0x54] sm:$0xf]
      %v1257 = vld [vmem:[%s1234 + $0x58] sm:$0xf]
      %v1258 = vld [vmem:[%s1234 + $0x5c] sm:$0xf]
      %v1283 = vunpack.c.l.b16 %v1235
      %v1284 = vunpack.c.l.b16 %v1236
      %v1285 = vunpack.c.l.b16 %v1237
      %v1286 = vunpack.c.l.b16 %v1238
      %v1287 = vunpack.c.l.b16 %v1239
      %v1288 = vunpack.c.l.b16 %v1240
      %v1289 = vunpack.c.l.b16 %v1241
      %v1290 = vunpack.c.l.b16 %v1242
      %v1291 = vunpack.c.l.b16 %v1243
      %v1292 = vunpack.c.l.b16 %v1244
      %v1293 = vunpack.c.l.b16 %v1245
      %v1294 = vunpack.c.l.b16 %v1246
      %v1295 = vunpack.c.l.b16 %v1247
      %v1296 = vunpack.c.l.b16 %v1248
      %v1297 = vunpack.c.l.b16 %v1249
      %v1298 = vunpack.c.l.b16 %v1250
      %v1299 = vunpack.c.l.b16 %v1251
      %v1300 = vunpack.c.l.b16 %v1252
      %v1301 = vunpack.c.l.b16 %v1253
      %v1302 = vunpack.c.l.b16 %v1254
      %v1303 = vunpack.c.l.b16 %v1255
      %v1304 = vunpack.c.l.b16 %v1256
      %v1305 = vunpack.c.l.b16 %v1257
      %v1306 = vunpack.c.l.b16 %v1258
      %v1307 = vpack.c.b16 %v1284, %v1283
      %v1308 = vpack.c.b16 %v1286, %v1285
      %v1309 = vpack.c.b16 %v1288, %v1287
      %v1310 = vpack.c.b16 %v1290, %v1289
      %v1311 = vpack.c.b16 %v1292, %v1291
      %v1312 = vpack.c.b16 %v1294, %v1293
      %v1313 = vpack.c.b16 %v1296, %v1295
      %v1314 = vpack.c.b16 %v1298, %v1297
      %v1315 = vpack.c.b16 %v1300, %v1299
      %v1316 = vpack.c.b16 %v1302, %v1301
      %v1317 = vpack.c.b16 %v1304, %v1303
      %v1318 = vpack.c.b16 %v1306, %v1305
      %v1332 = vsel %vm414, %v1214, 0
      %v1335 = vsel %vm414, %v1215, 0
      %v1338 = vsel %vm414, %v1216, 0
      %v1341 = vsel %vm414, %v1217, 0
      %1343 = vmatprep.subr.bf16.mxu0 0
      %1344 = vmatpush1.bf16.msra.mxu0 %v1307
      %1345 = vmatprep.subr.bf16.mxu0 0
      %1346 = vmatpush1.bf16.msra.mxu0 %v1308
      %1347 = vmatprep.subr.bf16.mxu0 0
      %1348 = vmatpush1.bf16.msra.mxu0 %v1309
      %1349 = vmatprep.subr.bf16.mxu0 0
      %1350 = vmatpush1.bf16.msra.mxu0 %v1310
      %1351 = vmatprep.subr.bf16.mxu0 0
      %1352 = vmatpush1.bf16.msra.mxu0 %v1311
      %1353 = vmatprep.subr.bf16.mxu0 0
      %1354 = vmatpush1.bf16.msra.mxu0 %v1312
      %1355 = vmatprep.subr.bf16.mxu0 0
      %1356 = vmatpush1.bf16.msra.mxu0 %v1313
      %1357 = vmatprep.subr.bf16.mxu0 0
      %1358 = vmatpush1.bf16.msra.mxu0 %v1314
      %1359 = vmatprep.subr.bf16.mxu0 0
      %1360 = vmatpush1.bf16.msra.mxu0 %v1315
      %1361 = vmatprep.subr.bf16.mxu0 0
      %1362 = vmatpush1.bf16.msra.mxu0 %v1316
      %1363 = vmatprep.subr.bf16.mxu0 0
      %1364 = vmatpush1.bf16.msra.mxu0 %v1317
      %1365 = vmatprep.subr.bf16.mxu0 0
      %1366 = vmatpush1.bf16.msra.mxu0 %v1318
      %1367 = vmatprep.subr.bf16.mxu0 0
      %1368 = vmatpush1.bf16.msra.mxu0 0
      %1369 = vmatprep.subr.bf16.mxu0 0
      %1370 = vmatpush1.bf16.msra.mxu0 0
      %1371 = vmatprep.subr.bf16.mxu0 0
      %1372 = vmatpush1.bf16.msra.mxu0 0
      %1373 = vmatprep.subr.bf16.mxu0 0
      %1374 = vmatpush1.bf16.msra.mxu0 0
      %1375 = vmatprep.mubr.bf16.mxu0 %v1332
      %1376 = vmatmul.mubr.bf16.gmra.mrb[0].mxu0 %v1220
      %v1377 = vpop.f32.mrb[0].mxu0
      %v1378 = vadd.f32 0.0, %v1377
      %v1379 = vpop.f32.mrb[0].mxu0
      %v1380 = vpop.f32.mrb[0].mxu0
      %v1381 = vadd.f32 0.0, %v1380
      %v1382 = vpop.f32.mrb[0].mxu0
      %1383 = vmatprep.mubr.bf16.mxu0 %v1335
      %1384 = vmatmul.mubr.bf16.gmra.mrb[0].mxu0 %v1224
      %v1385 = vpop.f32.mrb[0].mxu0
      %v1386 = vadd.f32 0.0, %v1385
      %v1387 = vpop.f32.mrb[0].mxu0
      %v1388 = vpop.f32.mrb[0].mxu0
      %v1389 = vadd.f32 0.0, %v1388
      %v1390 = vpop.f32.mrb[0].mxu0
      %1391 = vmatprep.mubr.bf16.mxu0 %v1338
      %1392 = vmatmul.mubr.bf16.gmra.mrb[0].mxu0 %v1228
      %v1393 = vpop.f32.mrb[0].mxu0
      %v1394 = vadd.f32 0.0, %v1393
      %v1395 = vpop.f32.mrb[0].mxu0
      %v1396 = vpop.f32.mrb[0].mxu0
      %v1397 = vadd.f32 0.0, %v1396
      %v1398 = vpop.f32.mrb[0].mxu0
      %1399 = vmatprep.mubr.bf16.mxu0 %v1341
      %1400 = vmatmul.mubr.bf16.gmra.mrb[0].mxu0 %v1232
      %v1401 = vpop.f32.mrb[0].mxu0
      %v1402 = vadd.f32 0.0, %v1401
      %v1403 = vpop.f32.mrb[0].mxu0
      %v1404 = vpop.f32.mrb[0].mxu0
      %v1405 = vadd.f32 0.0, %v1404
      %v1406 = vpop.f32.mrb[0].mxu0
      %1407 = vdwg.mxu0
      %v1408 = vadd.f32 %v1006, %v1378
      %v1409 = vadd.f32 %v1007, %v1381
      %v1410 = vadd.f32 %v1008, %v1386
      %v1411 = vadd.f32 %v1009, %v1389
      %v1412 = vadd.f32 %v1010, %v1394
      %v1413 = vadd.f32 %v1011, %v1397
      %v1414 = vadd.f32 %v1012, %v1402
      %v1415 = vadd.f32 %v1013, %v1405
      %v1416 = vmax.f32 %v1408, 0.0
      %v1417 = vmax.f32 %v1409, 0.0
      %v1418 = vmax.f32 %v1410, 0.0
      %v1419 = vmax.f32 %v1411, 0.0
      %v1420 = vmax.f32 %v1412, 0.0
      %v1421 = vmax.f32 %v1413, 0.0
      %v1422 = vmax.f32 %v1414, 0.0
      %v1423 = vmax.f32 %v1415, 0.0
      %1424 = vst [vmem:[%s194] sm:$0xff] %v1416
      %1425 = vst [vmem:[%s194 + $0x8] sm:$0xff] %v1417
      %1426 = vst [vmem:[%s194 + $0x10] sm:$0xff] %v1418
      %1427 = vst [vmem:[%s194 + $0x18] sm:$0xff] %v1419
      %1428 = vst [vmem:[%s194 + $0x20] sm:$0xff] %v1420
      %1429 = vst [vmem:[%s194 + $0x28] sm:$0xff] %v1421
      %1430 = vst [vmem:[%s194 + $0x30] sm:$0xff] %v1422
      %1431 = vst [vmem:[%s194 + $0x38] sm:$0xff] %v1423
      %s1432 = smul.u32 4, %s19
      %p1433 = scmp.lt.s32.totalorder %s18, 1
      %s1434 = scalar_select %p1433, %s18, 1
      %p1435 = scmp.lt.s32.totalorder %s1432, 7
      %s1436 = scalar_select %p1435, %s1432, 7
      %s1437 = smul.addr %s1436, 2
      %s1438 = smul.addr %s1434, 16
      %s1439 = sadd.s32 %s1437, %s1438
      %s1440 = smul.addr %s1439, 8
      %s1441 = scalar_lea.vmem %s3, %s1440
      // Predicated region
      $region33: #{conv3x3x3_bn_relu.1} parent=31 // pred_check
        %p1442 = pneg %p114
      $region34: #{conv3x3x3_bn_relu.1} parent=31 // pred_check_branch
        %1444 = sbr.rel (%p1442) target = $region36
      $region35: #{conv3x3x3_bn_relu.1} parent=31 // pred_region
        %s1445 = smul.u32 4, %s19
      $region36: #{conv3x3x3_bn_relu.1} parent=31 // pred_fallthru
        _
    $region32: #{conv3x3x3_bn_relu.1} parent=5 // pred_fallthru
      _
    %p1446 = scmp.le.s32.totalorder 2, %s9
    // Predicated region
    $region37: #{conv3x3x3_bn_relu.1} parent=5 // pred_check
      %p1447 = pneg %p1446
    $region38: #{conv3x3x3_bn_relu.1} parent=5 // pred_check_branch
      %1449 = sbr.rel (%p1447) target = $region40
    $region39: #{conv3x3x3_bn_relu.1} parent=5 // pred_region
      %s1450 = ssub.s32 %s9, 2
      // Predicated region
      $region41: #{conv3x3x3_bn_relu.1} parent=39 // pred_check
        %p1451 = pneg %p120
      $region42: #{conv3x3x3_bn_relu.1} parent=39 // pred_check_branch
        %1453 = sbr.rel (%p1451) target = $region44
      $region43: #{conv3x3x3_bn_relu.1} parent=39 // pred_region
        %s1454 = smul.u32 4, %s21
        %p1455 = scmp.lt.s32.totalorder %s20, 1
        %s1456 = scalar_select %p1455, %s20, 1
        %p1457 = scmp.lt.s32.totalorder %s1454, 7
        %s1458 = scalar_select %p1457, %s1454, 7
        %s1459 = smul.addr %s1458, 2
        %s1460 = smul.addr %s1456, 16
        %s1461 = sadd.s32 %s1459, %s1460
        %s1462 = smul.addr %s1461, 8
        %s1463 = scalar_lea.vmem %s3, %s1462
      $region44: #{conv3x3x3_bn_relu.1} parent=39 // pred_fallthru
        _
    $region40: #{conv3x3x3_bn_relu.1} parent=5 // pred_fallthru
      _
  $region6: #{conv3x3x3_bn_relu.1} parent=0 // loop_footer
    %s13 = sadd.s32 1, %s9
  $region7: #{conv3x3x3_bn_relu.1} parent=0 // loop_footer_branch
    %8 = sbr.rel target = $region3
  $region8: #{conv3x3x3_bn_relu.1} parent=0 // loop_exit
    _

</llo_original>
